<compile_context>
chip_gen: v7x
topology: tpu7x:2x2x1
jax: 0.10.0
libtpu: 0.0.40
codegen_flags: <defaults>
</compile_context>

<pallas_src>
import jax
import jax.numpy as jnp
from jax.experimental import pallas as pl
from jax.experimental.pallas import tpu as pltpu

_LANES = 128


def _copy_kernel(x_ref, o_ref):
    # Straight element-wise copy of the current (block_rows, 128) tile.
    o_ref[...] = x_ref[...]


def flatten_image(x, *, tile_rows=1024, lanes=_LANES):
    """Pallas equivalent of FlattenImage.forward: x.reshape(-1)."""
    total = x.size
    dt = jnp.dtype(x.dtype)
    itemsize = dt.itemsize
    # Packed-sublane multiple: 8 (32-bit), 16 (bf16/fp16), 32 (int8/fp8).
    sub = 8 * max(1, 4 // itemsize)

    x_flat = jnp.reshape(x, (-1,))

    # Pad only to the next multiple of 128 lanes (a no-op for typical NCHW
    # image tensors where total % 128 == 0).
    rem = total % lanes
    padded = rem != 0
    if padded:
        x_flat = jnp.pad(x_flat, (0, lanes - rem))

    rows = x_flat.size // lanes
    x2d = jnp.reshape(x_flat, (rows, lanes))

    if rows <= tile_rows:
        # Full-array block (always a legal block shape), single grid step.
        block_rows = rows
        grid = (1,)
    else:
        # Large block, rounded down to the packed-sublane multiple.
        block_rows = max((tile_rows // sub) * sub, sub)
        grid = (pl.cdiv(rows, block_rows),)

    out2d = pl.pallas_call(
        _copy_kernel,
        out_shape=jax.ShapeDtypeStruct((rows, lanes), x.dtype),
        grid_spec=pltpu.PrefetchScalarGridSpec(
            num_scalar_prefetch=0,
            grid=grid,
            in_specs=[pl.BlockSpec((block_rows, lanes), lambda i: (i, 0))],
            out_specs=pl.BlockSpec((block_rows, lanes), lambda i: (i, 0)),
        ),
        compiler_params=pltpu.CompilerParams(
            dimension_semantics=("parallel",),
        ),
        # Alias the flattened input buffer to the output: no separate output
        # allocation, lets XLA elide surrounding copies.
        input_output_aliases={0: 0},
        # Pure bandwidth: one HBM read + one HBM write of the tensor.
        cost_estimate=pl.CostEstimate(
            flops=0,
            transcendentals=0,
            bytes_accessed=2 * total * itemsize,
        ),
    )(x2d)

    out = jnp.reshape(out2d, (-1,))
    if padded:
        out = out[:total]
    return out


if __name__ == "__main__":
    key = jax.random.PRNGKey(0)

    # Small NCHW input consistent with an image tensor: batch=2, channels=4, 16x16.
    x = jax.random.normal(key, (2, 4, 16, 16), dtype=jnp.float32)
    y = jax.block_until_ready(flatten_image(x))
    ref = jnp.reshape(x, (-1,))
    assert y.shape == (2 * 4 * 16 * 16,), y.shape
    assert y.dtype == x.dtype
    assert bool(jnp.all(y == ref))

    # Also exercise the non-multiple-of-128 (padded) path with a tiny tensor.
    x2 = jax.random.normal(jax.random.PRNGKey(0), (2, 3, 5, 7), dtype=jnp.float32)
    y2 = jax.block_until_ready(flatten_image(x2))
    ref2 = jnp.reshape(x2, (-1,))
    assert y2.shape == (2 * 3 * 5 * 7,), y2.shape
    assert bool(jnp.all(y2 == ref2))

    print("KERNEL_OK")
</pallas_src>

<mosaic_0001>
module attributes {stable_mosaic.version = 11 : i64} {
  func.func @_copy_kernel(%arg0: i32, %arg1: memref<16x128xf32, #tpu.memory_space<vmem>>, %arg2: memref<16x128xf32, #tpu.memory_space<vmem>>) attributes {dimension_semantics = [#tpu.dimension_semantics<parallel>], iteration_bounds = array<i64: 1>, scalar_prefetch = 0 : i64, scratch_operands = 0 : i64, tpu.core_type = #tpu.core_type<tc>, window_params = [{transform_indices = @transform_0, window_bounds = array<i64: 16, 128>}, {transform_indices = @transform_1, window_bounds = array<i64: 16, 128>}]} {
    %c0 = arith.constant 0 : index
    %c0_0 = arith.constant 0 : index
    %0 = vector.load %arg1[%c0, %c0_0] : memref<16x128xf32, #tpu.memory_space<vmem>>, vector<16x128xf32>
    %c0_1 = arith.constant 0 : index
    %c0_2 = arith.constant 0 : index
    %1 = vector.load %arg2[%c0_1, %c0_2] : memref<16x128xf32, #tpu.memory_space<vmem>>, vector<16x128xf32>
    tpu.vector_store %arg2[%c0_1, %c0_2], %0 {strides = array<i32>} : memref<16x128xf32, #tpu.memory_space<vmem>>, vector<16x128xf32>,
    return
  }
  func.func @transform_0(%arg0: i32) -> (i32, i32) {
    %c0_i32 = arith.constant 0 : i32
    %c0_i32_0 = arith.constant 0 : i32
    return %arg0, %c0_i32 : i32, i32
  }
  func.func @transform_1(%arg0: i32) -> (i32, i32) {
    %c0_i32 = arith.constant 0 : i32
    %c0_i32_0 = arith.constant 0 : i32
    return %arg0, %c0_i32 : i32, i32
  }
}

</mosaic_0001>

<llo_original>
// kernel: tpu_custom_call.1
$region0: #{tpu_custom_call.1}
  #allocation0 [shape = 'u32[]', space=smem, size = 0x4, offset = 0x4, fixed_abs, tag = 'smem constant byte address 0x4 - core index']
  #allocation1 [shape = 'u32[144,128]{1,0:T(1,128)}', space=vmem, size = 0x12000, scoped, tag = 'internal scratch']
  %s0 = inlined_call_operand.hbm [shape: f32[16,128], index: 0, kind: input, shape index: {}, may-alias: {0,1}]
  %s1 = inlined_call_operand.hbm [shape: f32[16,128], index: 1, kind: output, shape index: {}, may-alias: {0,1}]
  %s2 = sld [smem:[#allocation0]]
  $region18: #{tpu_custom_call.1} parent=0
    _
  %s4 = ssub.s32 1, %s2
  %s5 = scalar_select 0, %s4, %s2
  $region1: #{tpu_custom_call.1} parent=0
    #allocation2 [shape = 'u8[8192]{0}', space=vmem, size = 0x2000, scoped, tag = 'input window, operand 0, single buffered']
    #allocation3 [shape = 's32[1]{0}', space=sflag, size = 0x4, scoped, tag = 'scoped memory for tpu_custom_call.1']
    #allocation4 [shape = 's32[1]{0}', space=sflag, size = 0x4, scoped, tag = 'scoped memory for tpu_custom_call.1']
    #allocation5 [shape = 'u8[8192]{0}', space=vmem, size = 0x2000, scoped, tag = 'output window, operand 0, single buffered']
    %6 = vsyncpa [#allocation3], 0
    %7 = vsyncpa [#allocation4], 0
    // Predicated region
    $region2: #{tpu_custom_call.1} parent=1 // pred_check
      _
    $region3: #{tpu_custom_call.1} parent=1 // pred_check_branch
      %9 = sbr.rel (0) target = $region5
    $region4: #{tpu_custom_call.1} parent=1 // pred_region
      %s11 = ssub.s32 256, 256
      %12 = vsyncadd [#allocation3], %s11
      %s13 = sshll.u32 [#allocation2], 4
      %s14 = int_to_ptr.vmem [resolvable:$true] %s13
      %19 = dma.hbm_to_vmem [thread:$0]  %s0, 256, %s14, [#allocation3], 128, 128, 8
    $region5: #{tpu_custom_call.1} parent=1 // pred_fallthru
      _
    // Predicated region
    $region6: #{tpu_custom_call.1} parent=1 // pred_check
      _
    $region7: #{tpu_custom_call.1} parent=1 // pred_check_branch
      %21 = sbr.rel (0) target = $region9
    $region8: #{tpu_custom_call.1} parent=1 // pred_region
      %22 = dma.done [#allocation3], 256
    $region9: #{tpu_custom_call.1} parent=1 // pred_fallthru
      _
    %v23 = vld [vmem:[#allocation2] sm:$0xff]
    %v24 = vld [vmem:[#allocation2 + $0x8] sm:$0xff]
    %25 = vst [vmem:[#allocation5] sm:$0xff] %v23
    %26 = vst [vmem:[#allocation5 + $0x8] sm:$0xff] %v24
    // Predicated region
    $region10: #{tpu_custom_call.1} parent=1 // pred_check
      _
    $region11: #{tpu_custom_call.1} parent=1 // pred_check_branch
      %28 = sbr.rel (0) target = $region13
    $region12: #{tpu_custom_call.1} parent=1 // pred_region
      %s30 = ssub.s32 256, 256
      %31 = vsyncadd [#allocation4], %s30
      %s32 = sshll.u32 [#allocation5], 4
      %s33 = int_to_ptr.vmem [resolvable:$true] %s32
      %38 = dma.vmem_to_hbm [thread:$0]  %s33, 256, %s1, [#allocation4], 128, 128, 8
    $region13: #{tpu_custom_call.1} parent=1 // pred_fallthru
      _
    // Predicated region
    $region14: #{tpu_custom_call.1} parent=1 // pred_check
      _
    $region15: #{tpu_custom_call.1} parent=1 // pred_check_branch
      %40 = sbr.rel (0) target = $region17
    $region16: #{tpu_custom_call.1} parent=1 // pred_region
      %41 = dma.done [#allocation4], 256
    $region17: #{tpu_custom_call.1} parent=1 // pred_fallthru
      _
    %42 = vsyncpa [#allocation3], 1
    %43 = vsyncpa [#allocation4], 1

</llo_original>
